<compile_context>
chip_gen: v7x
topology: tpu7x:2x2x1
jax: 0.10.0
libtpu: 0.0.40
codegen_flags: <defaults>
</compile_context>

<pallas_src>
import functools

import jax
import jax.numpy as jnp
from jax.experimental import pallas as pl
from jax.experimental.pallas import tpu as pltpu


_LANE = 512            # lane-dense columns (large multiple of 128)
_MAX_ROW_TILE = 512    # rows per tile -> <= (512, 512) f32 = 1 MiB per buffer
_FUSED_MAX_ROWS = 2048 # fused single-pass path up to 2048 x 512 f32 = 4 MiB


def _round_up(a, b):
    return (a + b - 1) // b * b


def _fused_kernel(x_ref, o_ref, *, inv_n):
    """Single pass: global sum + subtract, one HBM read and one HBM write."""
    x = x_ref[...]
    xf = x.astype(jnp.float32) if x.dtype != jnp.float32 else x
    # Sublane reduce first (cheap VPU vreg+vreg adds), then one cross-lane
    # reduce on the XLU.
    col = jnp.sum(xf, axis=0, keepdims=True)        # (1, LANE)
    tot = jnp.sum(col, axis=1, keepdims=True)       # (1, 1)
    mean = tot * jnp.float32(inv_n)                 # true-count mean (padding = 0)
    o_ref[...] = (xf - mean).astype(o_ref.dtype)


def _sum_kernel(x_ref, s_ref):
    """Phase A: accumulate the global sum into a resident (1,1) f32 output."""
    @pl.when(pl.program_id(0) == 0)
    def _():
        s_ref[...] = jnp.zeros_like(s_ref)

    x = x_ref[...]
    if x.dtype != jnp.float32:
        x = x.astype(jnp.float32)                   # widen for f32 accumulation
    col = jnp.sum(x, axis=0, keepdims=True)         # (1, LANE)  VPU
    s_ref[...] += jnp.sum(col, axis=1, keepdims=True)  # (1, 1)   XLU


def _sub_kernel(mean_ref, x_ref, o_ref):
    """Phase B: tiled subtract of the SMEM scalar mean (pure streaming VPU op)."""
    m = mean_ref[0, 0]
    o_ref[...] = x_ref[...] - m.astype(o_ref.dtype)


def centered_layer(x):
    """X - X.mean() over all elements, matching torch CenteredLayer semantics."""
    orig_shape = x.shape
    dtype = x.dtype
    n = x.size

    rows_needed = max(1, _round_up(n, _LANE) // _LANE)

    if rows_needed <= _FUSED_MAX_ROWS:
        # ---------- Fused single-pass path (one read, one write) ----------
        rows = _round_up(rows_needed, 8)
        padded_n = rows * _LANE
        x_flat = x.reshape(-1)
        if padded_n != n:
            x_flat = jnp.pad(x_flat, (0, padded_n - n))  # zeros don't perturb sum
        x2d = x_flat.reshape(rows, _LANE)

        out2d = pl.pallas_call(
            functools.partial(_fused_kernel, inv_n=1.0 / n),
            out_shape=jax.ShapeDtypeStruct((rows, _LANE), dtype),
            grid=(1,),
            in_specs=[pl.BlockSpec((rows, _LANE), lambda i: (0, 0))],
            out_specs=pl.BlockSpec((rows, _LANE), lambda i: (0, 0)),
            compiler_params=pltpu.CompilerParams(
                dimension_semantics=("arbitrary",)),
        )(x2d)
        return out2d.reshape(-1)[:n].reshape(orig_shape)

    # -------------------- Tiled two-phase path (large X) --------------------
    row_tile = _MAX_ROW_TILE
    rows = _round_up(rows_needed, row_tile)
    padded_n = rows * _LANE
    x_flat = x.reshape(-1)
    if padded_n != n:
        x_flat = jnp.pad(x_flat, (0, padded_n - n))
    x2d = x_flat.reshape(rows, _LANE)
    num_tiles = rows // row_tile

    # Phase A: global sum (sequential grid, resident VMEM accumulator).
    total = pl.pallas_call(
        _sum_kernel,
        out_shape=jax.ShapeDtypeStruct((1, 1), jnp.float32),
        grid=(num_tiles,),
        in_specs=[pl.BlockSpec((row_tile, _LANE), lambda i: (i, 0))],
        out_specs=pl.BlockSpec((1, 1), lambda i: (0, 0)),
        compiler_params=pltpu.CompilerParams(
            dimension_semantics=("arbitrary",)),
    )(x2d)

    # Mean over the TRUE element count (padding excluded).
    mean = total * jnp.float32(1.0 / n)  # (1, 1) f32

    # Phase B: pipelined tiled subtract (parallel across TensorCores).
    out2d = pl.pallas_call(
        _sub_kernel,
        out_shape=jax.ShapeDtypeStruct((rows, _LANE), dtype),
        grid=(num_tiles,),
        in_specs=[
            pl.BlockSpec(memory_space=pltpu.MemorySpace.SMEM),  # mean scalar
            pl.BlockSpec((row_tile, _LANE), lambda i: (i, 0)),  # x tiles
        ],
        out_specs=pl.BlockSpec((row_tile, _LANE), lambda i: (i, 0)),
        compiler_params=pltpu.CompilerParams(
            dimension_semantics=("parallel",)),
    )(mean, x2d)

    return out2d.reshape(-1)[:n].reshape(orig_shape)


if __name__ == "__main__":
    key = jax.random.PRNGKey(0)
    # Small NCHW-style input consistent with what the forward accepts.
    x = jax.random.normal(key, (2, 4, 16, 16), dtype=jnp.float32)

    fwd = jax.jit(centered_layer)
    out = jax.block_until_ready(fwd(x))

    # Correctness check vs. plain JAX reference.
    ref = x - jnp.mean(x)
    assert out.shape == x.shape
    assert jnp.allclose(out, ref, atol=1e-5), "mismatch vs reference"
    # Centered output should have ~zero mean (the module's defining property).
    assert abs(float(jnp.mean(out))) < 1e-5

    print("KERNEL_OK")
</pallas_src>

<mosaic_0001>
module attributes {stable_mosaic.version = 11 : i64} {
  func.func @_fused_kernel(%arg0: i32, %arg1: memref<8x512xf32, #tpu.memory_space<vmem>>, %arg2: memref<8x512xf32, #tpu.memory_space<vmem>>) attributes {dimension_semantics = [#tpu.dimension_semantics<arbitrary>], iteration_bounds = array<i64: 1>, scalar_prefetch = 0 : i64, scratch_operands = 0 : i64, tpu.core_type = #tpu.core_type<tc>, window_params = [{pipeline_mode = #tpu.pipeline_mode<synchronous>, transform_indices = @transform_0, window_bounds = array<i64: 8, 512>}, {pipeline_mode = #tpu.pipeline_mode<synchronous>, transform_indices = @transform_1, window_bounds = array<i64: 8, 512>}]} {
    %c0 = arith.constant 0 : index
    %c0_0 = arith.constant 0 : index
    %0 = vector.load %arg1[%c0, %c0_0] : memref<8x512xf32, #tpu.memory_space<vmem>>, vector<8x512xf32>
    %cst = arith.constant dense<0.000000e+00> : vector<512xf32>
    %1 = vector.multi_reduction <add>, %0, %cst [0] : vector<8x512xf32> to vector<512xf32>
    %2 = vector.shape_cast %1 : vector<512xf32> to vector<1x512xf32>
    %cst_1 = arith.constant dense<0.000000e+00> : vector<1xf32>
    %3 = vector.multi_reduction <add>, %2, %cst_1 [1] : vector<1x512xf32> to vector<1xf32>
    %4 = vector.shape_cast %3 : vector<1xf32> to vector<1x1xf32>
    %cst_2 = arith.constant 4.8828125E-4 : f32
    %5 = vector.broadcast %cst_2 : f32 to vector<1x1xf32>
    %6 = arith.mulf %4, %5 : vector<1x1xf32>
    %7 = vector.broadcast %6 : vector<1x1xf32> to vector<8x512xf32>
    %8 = arith.subf %0, %7 : vector<8x512xf32>
    %c0_3 = arith.constant 0 : index
    %c0_4 = arith.constant 0 : index
    %9 = vector.load %arg2[%c0_3, %c0_4] : memref<8x512xf32, #tpu.memory_space<vmem>>, vector<8x512xf32>
    tpu.vector_store %arg2[%c0_3, %c0_4], %8 {strides = array<i32>} : memref<8x512xf32, #tpu.memory_space<vmem>>, vector<8x512xf32>,
    return
  }
  func.func @transform_0(%arg0: i32) -> (i32, i32) {
    %c0_i32 = arith.constant 0 : i32
    %c0_i32_0 = arith.constant 0 : i32
    %c0_i32_1 = arith.constant 0 : i32
    return %c0_i32, %c0_i32_0 : i32, i32
  }
  func.func @transform_1(%arg0: i32) -> (i32, i32) {
    %c0_i32 = arith.constant 0 : i32
    %c0_i32_0 = arith.constant 0 : i32
    %c0_i32_1 = arith.constant 0 : i32
    return %c0_i32, %c0_i32_0 : i32, i32
  }
}

</mosaic_0001>

<llo_original>
// kernel: centered_layer.1
$region0: #{centered_layer.1}
  #allocation0 [shape = 'u32[]', space=smem, size = 0x4, offset = 0x4, fixed_abs, tag = 'smem constant byte address 0x4 - core index']
  #allocation1 [shape = 'u32[144,128]{1,0:T(1,128)}', space=vmem, size = 0x12000, scoped, tag = 'internal scratch']
  %s0 = inlined_call_operand.vmem [shape: f32[8,512], index: 0, kind: input, shape index: {}]
  %s1 = inlined_call_operand.vmem [shape: f32[8,512], index: 1, kind: output, shape index: {}]
  %s2 = sld [smem:[#allocation0]]
  $region14: #{centered_layer.1} parent=0
    _
  %s4 = ssub.s32 1, %s2
  %s5 = scalar_select 0, %s4, %s2
  // Predicated region
  $region2: #{centered_layer.1} parent=0 // pred_check
    _
  $region3: #{centered_layer.1} parent=0 // pred_check_branch
    %7 = sbr.rel (0) target = $region5
  $region4: #{centered_layer.1} parent=0 // pred_region
    _
  $region5: #{centered_layer.1} parent=0 // pred_fallthru
    _
  %v8 = vld [vmem:[%s0] sm:$0xff]
  %v9 = vld [vmem:[%s0 + $0x8] sm:$0xff]
  %v10 = vld [vmem:[%s0 + $0x10] sm:$0xff]
  %v11 = vld [vmem:[%s0 + $0x18] sm:$0xff]
  %v12 = vrot.slane %v8, 4
  %v13 = vadd.f32 %v8, %v12
  %v14 = vrot.slane %v13, 2
  %v15 = vadd.f32 %v13, %v14
  %v16 = vrot.slane %v15, 1
  %v17 = vadd.f32 %v15, %v16
  %v18 = vrot.slane %v9, 4
  %v19 = vadd.f32 %v9, %v18
  %v20 = vrot.slane %v19, 2
  %v21 = vadd.f32 %v19, %v20
  %v22 = vrot.slane %v21, 1
  %v23 = vadd.f32 %v21, %v22
  %v24 = vrot.slane %v10, 4
  %v25 = vadd.f32 %v10, %v24
  %v26 = vrot.slane %v25, 2
  %v27 = vadd.f32 %v25, %v26
  %v28 = vrot.slane %v27, 1
  %v29 = vadd.f32 %v27, %v28
  %v30 = vrot.slane %v11, 4
  %v31 = vadd.f32 %v11, %v30
  %v32 = vrot.slane %v31, 2
  %v33 = vadd.f32 %v31, %v32
  %v34 = vrot.slane %v33, 1
  %v35 = vadd.f32 %v33, %v34
  %v36 = vadd.f32 %v17, %v23
  %v37 = vadd.f32 %v36, %v29
  %v38 = vadd.f32 %v37, %v35
  %39 = vadd.xlane.f32.xlu0 %v38
  %v40 = vpop.xlane.xlu0 %39
  %v41 = vmul.f32 %v40, 0.00048828125
  %v42 = vsub.f32 %v8, %v41
  %v43 = vsub.f32 %v9, %v41
  %v44 = vsub.f32 %v10, %v41
  %v45 = vsub.f32 %v11, %v41
  %46 = vst [vmem:[%s1] sm:$0xff] %v42
  %47 = vst [vmem:[%s1 + $0x8] sm:$0xff] %v43
  %48 = vst [vmem:[%s1 + $0x10] sm:$0xff] %v44
  %49 = vst [vmem:[%s1 + $0x18] sm:$0xff] %v45
  // Predicated region
  $region6: #{centered_layer.1} parent=0 // pred_check
    _
  $region7: #{centered_layer.1} parent=0 // pred_check_branch
    %51 = sbr.rel (0) target = $region9
  $region8: #{centered_layer.1} parent=0 // pred_region
    _
  $region9: #{centered_layer.1} parent=0 // pred_fallthru
    _
  // Predicated region
  $region10: #{centered_layer.1} parent=0 // pred_check
    _
  $region11: #{centered_layer.1} parent=0 // pred_check_branch
    %53 = sbr.rel (0) target = $region13
  $region12: #{centered_layer.1} parent=0 // pred_region
    _
  $region13: #{centered_layer.1} parent=0 // pred_fallthru
    _

</llo_original>
